<compile_context>
chip_gen: v7x
topology: tpu7x:2x2x1
jax: 0.10.0
libtpu: 0.0.40
codegen_flags: <defaults>
</compile_context>

<pallas_src>
import math
import functools

import jax
import jax.numpy as jnp
from jax.experimental import pallas as pl
from jax.experimental.pallas import tpu as pltpu

_LANE = 128
_SUBLANE = 8
_INV_SQRT2 = 1.0 / math.sqrt(2.0)
_INV_SQRT_2PI = 1.0 / math.sqrt(2.0 * math.pi)


def _fast_dropout_kernel(x_ref, wt_ref, w2t_ref, b_ref, o_ref, *, keep_prob):
    x = x_ref[...]            # [tb, In]        (f32)
    wt = wt_ref[...]          # [In, Out_p]     (VMEM-resident across grid)
    w2t = w2t_ref[...]        # [In, Out_p]     (pre-squared in wrapper)
    b = b_ref[...]            # [1, Out_p]

    # mean_out = x @ W.T + b   (lane-dense RHS, no in-kernel transpose)
    mean = jnp.dot(x, wt, preferred_element_type=jnp.float32) + b

    # variance_out = (kp*(1-kp)*x^2) @ (W.T)^2
    tmp = (keep_prob * (1.0 - keep_prob)) * (x * x)
    var = jnp.dot(tmp, w2t, preferred_element_type=jnp.float32)

    # r = mean / var  (exactly as in the reference).
    # NOTE: pl.reciprocal(var, approx=True) would move this to the EUP slot but
    # its error is amplified for small var (r feeds erf) -> kept exact.
    r = mean / var

    cdf = 0.5 * (1.0 + jax.lax.erf(r * _INV_SQRT2))        # Normal(0,1).cdf(r)
    pdf = jnp.exp(-0.5 * r * r) * _INV_SQRT_2PI            # exp(Normal(0,1).log_prob(r))

    o_ref[...] = (cdf * mean + jnp.sqrt(var) * pdf).astype(o_ref.dtype)


def _round_up(v, m):
    return ((v + m - 1) // m) * m


def fast_dropout_forward(x, weight, bias, keep_prob, *, block_b=512):
    """x: [B, In] f32, weight: [Out, In] f32, bias: [Out] f32 -> [B, Out] f32."""
    B, In = x.shape
    Out = weight.shape[0]

    # --- wrapper-side weight prep (done once, outside the kernel) -----------
    w_t = weight.T                       # [In, Out]
    w2_t = w_t * w_t                     # [In, Out]  pre-squared
    b2d = bias.reshape(1, Out)

    # Lane-dense output: pad the Out (lane) dimension up to a multiple of 128.
    out_p = max(_LANE, _round_up(Out, _LANE))
    if out_p != Out:
        pad = out_p - Out
        w_t = jnp.pad(w_t, ((0, 0), (0, pad)))
        w2_t = jnp.pad(w2_t, ((0, 0), (0, pad)))
        b2d = jnp.pad(b2d, ((0, 0), (0, pad)))

    # Batch tiling: tile of up to `block_b` rows (multiple of 8 sublanes).
    tb = min(_round_up(block_b, _SUBLANE), _round_up(B, _SUBLANE))
    b_p = _round_up(B, tb)
    if b_p != B:
        x = jnp.pad(x, ((0, b_p - B), (0, 0)))
    grid_b = b_p // tb

    # VMEM budget: resident W_t + W_t^2 + bias, plus double-buffered x/out tiles.
    # TODO(synk): for weights too large for v7x's 64 MiB VMEM, add a K/N-tiled
    # reduction axis (or bf16 weights) instead of keeping the full weight resident.
    f32 = 4
    budget = (2 * In * out_p + out_p) * f32 \
        + 2 * (tb * In + tb * out_p) * f32 + (2 << 20)
    vmem_limit = max(16 << 20, min(int(budget), 96 << 20))

    kernel = functools.partial(_fast_dropout_kernel, keep_prob=float(keep_prob))

    out_padded = pl.pallas_call(
        kernel,
        out_shape=jax.ShapeDtypeStruct((b_p, out_p), jnp.float32),
        grid_spec=pl.GridSpec(
            grid=(grid_b,),
            in_specs=[
                pl.BlockSpec((tb, In), lambda i: (i, 0)),       # x: batch-tiled
                pl.BlockSpec((In, out_p), lambda i: (0, 0)),    # W_t: resident
                pl.BlockSpec((In, out_p), lambda i: (0, 0)),    # W_t^2: resident
                pl.BlockSpec((1, out_p), lambda i: (0, 0)),     # bias: resident
            ],
            out_specs=pl.BlockSpec((tb, out_p), lambda i: (i, 0)),
        ),
        compiler_params=pltpu.CompilerParams(
            dimension_semantics=("parallel",),
            vmem_limit_bytes=vmem_limit,
        ),
    )(x, w_t, w2_t, b2d)

    return out_padded[:B, :Out]


def init_params(key, in_features, out_features):
    """Deterministic init mirroring PyTorch kaiming_uniform_(a=sqrt(5)) + bias init.

    For a=sqrt(5): bound = sqrt(6 / ((1 + a^2) * fan_in)) = 1/sqrt(fan_in).
    Bias: uniform(-1/sqrt(fan_in), 1/sqrt(fan_in)).
    """
    kw, kb = jax.random.split(key)
    bound = 1.0 / math.sqrt(in_features)
    weight = jax.random.uniform(kw, (out_features, in_features), jnp.float32,
                                minval=-bound, maxval=bound)
    bias = jax.random.uniform(kb, (out_features,), jnp.float32,
                              minval=-bound, maxval=bound)
    return weight, bias


def _reference(x, weight, bias, keep_prob):
    mean = x @ weight.T + bias[None, :]
    var = (keep_prob * (1 - keep_prob) * x ** 2) @ (weight.T ** 2)
    r = mean / var
    cdf = 0.5 * (1.0 + jax.lax.erf(r / jnp.sqrt(2.0)))
    pdf = jnp.exp(-0.5 * r * r) / jnp.sqrt(2.0 * jnp.pi)
    return cdf * mean + jnp.sqrt(var) * pdf


if __name__ == "__main__":
    key = jax.random.PRNGKey(0)
    batch, in_features, out_features = 8, 32, 32
    dropout = 0.5
    keep_prob = 1.0 - dropout

    kx, kp = jax.random.split(key)
    x = jax.random.normal(kx, (batch, in_features), dtype=jnp.float32)
    weight, bias = init_params(kp, in_features, out_features)

    out = fast_dropout_forward(x, weight, bias, keep_prob)
    out = jax.block_until_ready(out)

    ref = _reference(x, weight, bias, keep_prob)
    assert out.shape == (batch, out_features)
    assert jnp.allclose(out, ref, rtol=1e-5, atol=1e-5), "mismatch vs reference"

    print("KERNEL_OK")
</pallas_src>

<mosaic_0001>
module attributes {stable_mosaic.version = 11 : i64} {
  func.func @_fast_dropout_kernel(%arg0: i32, %arg1: memref<8x32xf32, #tpu.memory_space<vmem>>, %arg2: memref<32x128xf32, #tpu.memory_space<vmem>>, %arg3: memref<32x128xf32, #tpu.memory_space<vmem>>, %arg4: memref<1x128xf32, #tpu.memory_space<vmem>>, %arg5: memref<8x128xf32, #tpu.memory_space<vmem>>) attributes {dimension_semantics = [#tpu.dimension_semantics<parallel>], iteration_bounds = array<i64: 1>, scalar_prefetch = 0 : i64, scratch_operands = 0 : i64, tpu.core_type = #tpu.core_type<tc>, window_params = [{transform_indices = @transform_0, window_bounds = array<i64: 8, 32>}, {pipeline_mode = #tpu.pipeline_mode<synchronous>, transform_indices = @transform_1, window_bounds = array<i64: 32, 128>}, {pipeline_mode = #tpu.pipeline_mode<synchronous>, transform_indices = @transform_2, window_bounds = array<i64: 32, 128>}, {pipeline_mode = #tpu.pipeline_mode<synchronous>, transform_indices = @transform_3, window_bounds = array<i64: 1, 128>}, {transform_indices = @transform_4, window_bounds = array<i64: 8, 128>}]} {
    %c0 = arith.constant 0 : index
    %c0_0 = arith.constant 0 : index
    %0 = vector.load %arg1[%c0, %c0_0] : memref<8x32xf32, #tpu.memory_space<vmem>>, vector<8x32xf32>
    %c0_1 = arith.constant 0 : index
    %c0_2 = arith.constant 0 : index
    %1 = vector.load %arg2[%c0_1, %c0_2] : memref<32x128xf32, #tpu.memory_space<vmem>>, vector<32x128xf32>
    %c0_3 = arith.constant 0 : index
    %c0_4 = arith.constant 0 : index
    %2 = vector.load %arg3[%c0_3, %c0_4] : memref<32x128xf32, #tpu.memory_space<vmem>>, vector<32x128xf32>
    %c0_5 = arith.constant 0 : index
    %c0_6 = arith.constant 0 : index
    %3 = vector.load %arg4[%c0_5, %c0_6] : memref<1x128xf32, #tpu.memory_space<vmem>>, vector<1x128xf32>
    %cst = arith.constant dense<0.000000e+00> : vector<8x128xf32>
    %4 = tpu.matmul %0, %1, %cst {dimension_numbers = #tpu.dot_dimension_numbers<[1], [0], [0], [1], [0, 0, 1, 1], [], []>} : vector<8x32xf32>, vector<32x128xf32>, vector<8x128xf32> -> vector<8x128xf32>
    %5 = vector.broadcast %3 : vector<1x128xf32> to vector<8x128xf32>
    %6 = arith.addf %4, %5 : vector<8x128xf32>
    %7 = arith.mulf %0, %0 : vector<8x32xf32>
    %cst_7 = arith.constant 2.500000e-01 : f32
    %8 = vector.broadcast %cst_7 : f32 to vector<8x32xf32>
    %9 = arith.mulf %8, %7 : vector<8x32xf32>
    %cst_8 = arith.constant dense<0.000000e+00> : vector<8x128xf32>
    %10 = tpu.matmul %9, %2, %cst_8 {dimension_numbers = #tpu.dot_dimension_numbers<[1], [0], [0], [1], [0, 0, 1, 1], [], []>} : vector<8x32xf32>, vector<32x128xf32>, vector<8x128xf32> -> vector<8x128xf32>
    %11 = arith.divf %6, %10 : vector<8x128xf32>
    %cst_9 = arith.constant 0.707106769 : f32
    %12 = vector.broadcast %cst_9 : f32 to vector<8x128xf32>
    %13 = arith.mulf %11, %12 : vector<8x128xf32>
    %14 = math.erf %13 : vector<8x128xf32>
    %cst_10 = arith.constant 1.000000e+00 : f32
    %15 = vector.broadcast %cst_10 : f32 to vector<8x128xf32>
    %16 = arith.addf %15, %14 : vector<8x128xf32>
    %cst_11 = arith.constant 5.000000e-01 : f32
    %17 = vector.broadcast %cst_11 : f32 to vector<8x128xf32>
    %18 = arith.mulf %17, %16 : vector<8x128xf32>
    %cst_12 = arith.constant -5.000000e-01 : f32
    %19 = vector.broadcast %cst_12 : f32 to vector<8x128xf32>
    %20 = arith.mulf %19, %11 : vector<8x128xf32>
    %21 = arith.mulf %20, %11 : vector<8x128xf32>
    %22 = math.exp %21 : vector<8x128xf32>
    %cst_13 = arith.constant 0.398942292 : f32
    %23 = vector.broadcast %cst_13 : f32 to vector<8x128xf32>
    %24 = arith.mulf %22, %23 : vector<8x128xf32>
    %25 = arith.mulf %18, %6 : vector<8x128xf32>
    %26 = math.sqrt %10 : vector<8x128xf32>
    %27 = arith.mulf %26, %24 : vector<8x128xf32>
    %28 = arith.addf %25, %27 : vector<8x128xf32>
    %c0_14 = arith.constant 0 : index
    %c0_15 = arith.constant 0 : index
    %29 = vector.load %arg5[%c0_14, %c0_15] : memref<8x128xf32, #tpu.memory_space<vmem>>, vector<8x128xf32>
    tpu.vector_store %arg5[%c0_14, %c0_15], %28 {strides = array<i32>} : memref<8x128xf32, #tpu.memory_space<vmem>>, vector<8x128xf32>,
    return
  }
  func.func @transform_0(%arg0: i32) -> (i32, i32) {
    %c0_i32 = arith.constant 0 : i32
    %c0_i32_0 = arith.constant 0 : i32
    return %arg0, %c0_i32 : i32, i32
  }
  func.func @transform_1(%arg0: i32) -> (i32, i32) {
    %c0_i32 = arith.constant 0 : i32
    %c0_i32_0 = arith.constant 0 : i32
    %c0_i32_1 = arith.constant 0 : i32
    return %c0_i32, %c0_i32_0 : i32, i32
  }
  func.func @transform_2(%arg0: i32) -> (i32, i32) {
    %c0_i32 = arith.constant 0 : i32
    %c0_i32_0 = arith.constant 0 : i32
    %c0_i32_1 = arith.constant 0 : i32
    return %c0_i32, %c0_i32_0 : i32, i32
  }
  func.func @transform_3(%arg0: i32) -> (i32, i32) {
    %c0_i32 = arith.constant 0 : i32
    %c0_i32_0 = arith.constant 0 : i32
    %c0_i32_1 = arith.constant 0 : i32
    return %c0_i32, %c0_i32_0 : i32, i32
  }
  func.func @transform_4(%arg0: i32) -> (i32, i32) {
    %c0_i32 = arith.constant 0 : i32
    %c0_i32_0 = arith.constant 0 : i32
    return %arg0, %c0_i32 : i32, i32
  }
}

</mosaic_0001>

<llo_original>
// kernel: tpu_custom_call.1
$region0: #{tpu_custom_call.1}
  #allocation0 [shape = 'u32[]', space=smem, size = 0x4, offset = 0x4, fixed_abs, tag = 'smem constant byte address 0x4 - core index']
  #allocation1 [shape = 'u32[144,128]{1,0:T(1,128)}', space=vmem, size = 0x12000, scoped, tag = 'internal scratch']
  %s0 = inlined_call_operand.hbm [shape: f32[8,32], index: 0, kind: input, shape index: {}]
  %s1 = inlined_call_operand.hbm [shape: f32[32,128], index: 1, kind: input, shape index: {}]
  %s2 = inlined_call_operand.hbm [shape: f32[32,128], index: 2, kind: input, shape index: {}]
  %s3 = inlined_call_operand.vmem [shape: f32[1,128], index: 3, kind: input, shape index: {}]
  %s4 = inlined_call_operand.hbm [shape: f32[8,128], index: 4, kind: output, shape index: {}]
  %s5 = sld [smem:[#allocation0]]
  $region38: #{tpu_custom_call.1} parent=0
    _
  %s7 = ssub.s32 1, %s5
  %s8 = scalar_select 0, %s7, %s5
  $region1: #{tpu_custom_call.1} parent=0
    #allocation2 [shape = 'u8[4096]{0}', space=vmem, size = 0x1000, scoped, tag = 'input window, operand 0, single buffered']
    #allocation3 [shape = 's32[1]{0}', space=sflag, size = 0x4, scoped, tag = 'scoped memory for tpu_custom_call.1']
    #allocation4 [shape = 's32[1]{0}', space=sflag, size = 0x4, scoped, tag = 'scoped memory for tpu_custom_call.1']
    #allocation5 [shape = 'u8[16384]{0}', space=vmem, size = 0x4000, scoped, tag = 'input window, operand 1, single buffered']
    #allocation6 [shape = 's32[1]{0}', space=sflag, size = 0x4, scoped, tag = 'scoped memory for tpu_custom_call.1']
    #allocation7 [shape = 'u8[16384]{0}', space=vmem, size = 0x4000, scoped, tag = 'input window, operand 2, single buffered']
    #allocation8 [shape = 'u8[4096]{0}', space=vmem, size = 0x1000, scoped, tag = 'output window, operand 0, single buffered']
    %9 = vsyncpa [#allocation3], 0
    %10 = vsyncpa [#allocation6], 0
    %11 = vsyncpa [#allocation4], 0
    // Predicated region
    $region2: #{tpu_custom_call.1} parent=1 // pred_check
      _
    $region3: #{tpu_custom_call.1} parent=1 // pred_check_branch
      %13 = sbr.rel (0) target = $region5
    $region4: #{tpu_custom_call.1} parent=1 // pred_region
      %s15 = ssub.s32 128, 128
      %16 = vsyncadd [#allocation3], %s15
      %s18 = sshll.u32 [#allocation2], 4
      %s19 = int_to_ptr.vmem [resolvable:$true] %s18
      %21 = dma.hbm_to_vmem [thread:$0]  %s0, 128, %s19, [#allocation3]
    $region5: #{tpu_custom_call.1} parent=1 // pred_fallthru
      _
    // Predicated region
    $region6: #{tpu_custom_call.1} parent=1 // pred_check
      _
    $region7: #{tpu_custom_call.1} parent=1 // pred_check_branch
      %23 = sbr.rel (0) target = $region9
    $region8: #{tpu_custom_call.1} parent=1 // pred_region
      %s25 = ssub.s32 512, 512
      %26 = vsyncadd [#allocation6], %s25
      %s27 = sshll.u32 [#allocation5], 4
      %s28 = int_to_ptr.vmem [resolvable:$true] %s27
      %33 = dma.hbm_to_vmem [thread:$0]  %s1, 512, %s28, [#allocation6], 128, 128, 8
    $region9: #{tpu_custom_call.1} parent=1 // pred_fallthru
      _
    // Predicated region
    $region10: #{tpu_custom_call.1} parent=1 // pred_check
      _
    $region11: #{tpu_custom_call.1} parent=1 // pred_check_branch
      %35 = sbr.rel (0) target = $region13
    $region12: #{tpu_custom_call.1} parent=1 // pred_region
      %s37 = ssub.s32 512, 512
      %38 = vsyncadd [#allocation6], %s37
      %s39 = sshll.u32 [#allocation7], 4
      %s40 = int_to_ptr.vmem [resolvable:$true] %s39
      %45 = dma.hbm_to_vmem [thread:$0]  %s2, 512, %s40, [#allocation6], 128, 128, 8
    $region13: #{tpu_custom_call.1} parent=1 // pred_fallthru
      _
    // Predicated region
    $region14: #{tpu_custom_call.1} parent=1 // pred_check
      _
    $region15: #{tpu_custom_call.1} parent=1 // pred_check_branch
      %47 = sbr.rel (0) target = $region17
    $region16: #{tpu_custom_call.1} parent=1 // pred_region
      _
    $region17: #{tpu_custom_call.1} parent=1 // pred_fallthru
      _
    // Predicated region
    $region18: #{tpu_custom_call.1} parent=1 // pred_check
      _
    $region19: #{tpu_custom_call.1} parent=1 // pred_check_branch
      %49 = sbr.rel (0) target = $region21
    $region20: #{tpu_custom_call.1} parent=1 // pred_region
      %50 = dma.done [#allocation3], 128
    $region21: #{tpu_custom_call.1} parent=1 // pred_fallthru
      _
    // Predicated region
    $region22: #{tpu_custom_call.1} parent=1 // pred_check
      _
    $region23: #{tpu_custom_call.1} parent=1 // pred_check_branch
      %52 = sbr.rel (0) target = $region25
    $region24: #{tpu_custom_call.1} parent=1 // pred_region
      %53 = dma.done [#allocation6], 512
    $region25: #{tpu_custom_call.1} parent=1 // pred_fallthru
      _
    // Predicated region
    $region26: #{tpu_custom_call.1} parent=1 // pred_check
      _
    $region27: #{tpu_custom_call.1} parent=1 // pred_check_branch
      %55 = sbr.rel (0) target = $region29
    $region28: #{tpu_custom_call.1} parent=1 // pred_region
      %56 = dma.done [#allocation6], 512
    $region29: #{tpu_custom_call.1} parent=1 // pred_fallthru
      _
    %v57 = vld [vmem:[#allocation2] sm:$0xff]
    %v58 = vld [vmem:[#allocation5] sm:$0xff]
    %v59 = vld [vmem:[#allocation5 + $0x8] sm:$0xff]
    %v60 = vld [vmem:[#allocation5 + $0x10] sm:$0xff]
    %v61 = vld [vmem:[#allocation5 + $0x18] sm:$0xff]
    %v62 = vld [vmem:[#allocation7] sm:$0xff]
    %v63 = vld [vmem:[#allocation7 + $0x8] sm:$0xff]
    %v64 = vld [vmem:[#allocation7 + $0x10] sm:$0xff]
    %v65 = vld [vmem:[#allocation7 + $0x18] sm:$0xff]
    %v66 = vld [vmem:[%s3] sm:$0x1]
    %v68 = vlaneseq
    %v69 = vshrl.u32 %v68, 7
    %v70 = vsub.s32 0, %v69
    %v71 = vrot.slane %v66, %v70
    %vm73 = vcmask 261120
    %v75 = vsel %vm73, %v57, 0
    %77 = vmatprep.subr.mxu0 0.0
    %78 = vmatpush1.msra.mxu0 %v58
    %79 = vmatprep.subr.mxu0 0.0
    %80 = vmatpush1.msra.mxu0 %v59
    %81 = vmatprep.subr.mxu0 0.0
    %82 = vmatpush1.msra.mxu0 %v60
    %83 = vmatprep.subr.mxu0 0.0
    %84 = vmatpush1.msra.mxu0 %v61
    %85 = vmatprep.subr.mxu0 0.0
    %86 = vmatpush1.msra.mxu0 0.0
    %87 = vmatprep.subr.mxu0 0.0
    %88 = vmatpush1.msra.mxu0 0.0
    %89 = vmatprep.subr.mxu0 0.0
    %90 = vmatpush1.msra.mxu0 0.0
    %91 = vmatprep.subr.mxu0 0.0
    %92 = vmatpush1.msra.mxu0 0.0
    %93 = vmatprep.subr.mxu0 0.0
    %94 = vmatpush1.msra.mxu0 0.0
    %95 = vmatprep.subr.mxu0 0.0
    %96 = vmatpush1.msra.mxu0 0.0
    %97 = vmatprep.subr.mxu0 0.0
    %98 = vmatpush1.msra.mxu0 0.0
    %99 = vmatprep.subr.mxu0 0.0
    %100 = vmatpush1.msra.mxu0 0.0
    %101 = vmatprep.subr.mxu0 0.0
    %102 = vmatpush1.msra.mxu0 0.0
    %103 = vmatprep.subr.mxu0 0.0
    %104 = vmatpush1.msra.mxu0 0.0
    %105 = vmatprep.subr.mxu0 0.0
    %106 = vmatpush1.msra.mxu0 0.0
    %107 = vmatprep.subr.mxu0 0.0
    %108 = vmatpush1.msra.mxu0 0.0
    %109 = vmatprep.subr.mxu0 0.0
    %110 = vmatpush1.msra.mxu0 0.0
    %111 = vmatprep.subr.mxu0 0.0
    %112 = vmatpush1.msra.mxu0 0.0
    %113 = vmatprep.subr.mxu0 0.0
    %114 = vmatpush1.msra.mxu0 0.0
    %115 = vmatprep.subr.mxu0 0.0
    %116 = vmatpush1.msra.mxu0 0.0
    %117 = vmatprep.subr.mxu0 0.0
    %118 = vmatpush1.msra.mxu0 0.0
    %119 = vmatprep.subr.mxu0 0.0
    %120 = vmatpush1.msra.mxu0 0.0
    %121 = vmatprep.subr.mxu0 0.0
    %122 = vmatpush1.msra.mxu0 0.0
    %123 = vmatprep.subr.mxu0 0.0
    %124 = vmatpush1.msra.mxu0 0.0
    %125 = vmatprep.subr.mxu0 0.0
    %126 = vmatpush1.msra.mxu0 0.0
    %127 = vmatprep.subr.mxu0 0.0
    %128 = vmatpush1.msra.mxu0 0.0
    %129 = vmatprep.subr.mxu0 0.0
    %130 = vmatpush1.msra.mxu0 0.0
    %131 = vmatprep.subr.mxu0 0.0
    %132 = vmatpush1.msra.mxu0 0.0
    %133 = vmatprep.subr.mxu0 0.0
    %134 = vmatpush1.msra.mxu0 0.0
    %135 = vmatprep.subr.mxu0 0.0
    %136 = vmatpush1.msra.mxu0 0.0
    %137 = vmatprep.subr.mxu0 0.0
    %138 = vmatpush1.msra.mxu0 0.0
    %139 = vmatprep.subr.mxu0 0.0
    %140 = vmatpush1.msra.mxu0 0.0
    %141 = vmatprep.mubr.f32.mxu0 0.0
    %142 = vmatmul.mubr.f32.gmra.mrb[0].mxu0 %v75
    %v143 = vpop.f32.mrb[0].mxu0
    %v144 = vadd.f32 %v71, %v143
    %v145 = vpop.f32.mrb[0].mxu0
    %146 = vdwg.mxu0
    %v147 = vmul.f32 %v57, %v57
    %v148 = vmul.f32 %v147, 0.25
    %v150 = vsel %vm73, %v148, 0
    %152 = vmatprep.subr.mxu0 0.0
    %153 = vmatpush1.msra.mxu0 %v62
    %154 = vmatprep.subr.mxu0 0.0
    %155 = vmatpush1.msra.mxu0 %v63
    %156 = vmatprep.subr.mxu0 0.0
    %157 = vmatpush1.msra.mxu0 %v64
    %158 = vmatprep.subr.mxu0 0.0
    %159 = vmatpush1.msra.mxu0 %v65
    %160 = vmatprep.subr.mxu0 0.0
    %161 = vmatpush1.msra.mxu0 0.0
    %162 = vmatprep.subr.mxu0 0.0
    %163 = vmatpush1.msra.mxu0 0.0
    %164 = vmatprep.subr.mxu0 0.0
    %165 = vmatpush1.msra.mxu0 0.0
    %166 = vmatprep.subr.mxu0 0.0
    %167 = vmatpush1.msra.mxu0 0.0
    %168 = vmatprep.subr.mxu0 0.0
    %169 = vmatpush1.msra.mxu0 0.0
    %170 = vmatprep.subr.mxu0 0.0
    %171 = vmatpush1.msra.mxu0 0.0
    %172 = vmatprep.subr.mxu0 0.0
    %173 = vmatpush1.msra.mxu0 0.0
    %174 = vmatprep.subr.mxu0 0.0
    %175 = vmatpush1.msra.mxu0 0.0
    %176 = vmatprep.subr.mxu0 0.0
    %177 = vmatpush1.msra.mxu0 0.0
    %178 = vmatprep.subr.mxu0 0.0
    %179 = vmatpush1.msra.mxu0 0.0
    %180 = vmatprep.subr.mxu0 0.0
    %181 = vmatpush1.msra.mxu0 0.0
    %182 = vmatprep.subr.mxu0 0.0
    %183 = vmatpush1.msra.mxu0 0.0
    %184 = vmatprep.subr.mxu0 0.0
    %185 = vmatpush1.msra.mxu0 0.0
    %186 = vmatprep.subr.mxu0 0.0
    %187 = vmatpush1.msra.mxu0 0.0
    %188 = vmatprep.subr.mxu0 0.0
    %189 = vmatpush1.msra.mxu0 0.0
    %190 = vmatprep.subr.mxu0 0.0
    %191 = vmatpush1.msra.mxu0 0.0
    %192 = vmatprep.subr.mxu0 0.0
    %193 = vmatpush1.msra.mxu0 0.0
    %194 = vmatprep.subr.mxu0 0.0
    %195 = vmatpush1.msra.mxu0 0.0
    %196 = vmatprep.subr.mxu0 0.0
    %197 = vmatpush1.msra.mxu0 0.0
    %198 = vmatprep.subr.mxu0 0.0
    %199 = vmatpush1.msra.mxu0 0.0
    %200 = vmatprep.subr.mxu0 0.0
    %201 = vmatpush1.msra.mxu0 0.0
    %202 = vmatprep.subr.mxu0 0.0
    %203 = vmatpush1.msra.mxu0 0.0
    %204 = vmatprep.subr.mxu0 0.0
    %205 = vmatpush1.msra.mxu0 0.0
    %206 = vmatprep.subr.mxu0 0.0
    %207 = vmatpush1.msra.mxu0 0.0
    %208 = vmatprep.subr.mxu0 0.0
    %209 = vmatpush1.msra.mxu0 0.0
    %210 = vmatprep.subr.mxu0 0.0
    %211 = vmatpush1.msra.mxu0 0.0
    %212 = vmatprep.subr.mxu0 0.0
    %213 = vmatpush1.msra.mxu0 0.0
    %214 = vmatprep.subr.mxu0 0.0
    %215 = vmatpush1.msra.mxu0 0.0
    %216 = vmatprep.mubr.f32.mxu0 0.0
    %217 = vmatmul.mubr.f32.gmra.mrb[0].mxu0 %v150
    %v218 = vpop.f32.mrb[0].mxu0
    %v219 = vadd.f32 0.0, %v218
    %v220 = vpop.f32.mrb[0].mxu0
    %221 = vdwg.mxu0
    %v222 = vrcp.pop %v219
    %v223 = vmul.f32 %v144, %v222
    %v224 = vmul.f32 %v223, 0.70710677
    %v225 = verf.f32.pop %v224
    %v226 = vadd.f32 %v225, 1.0
    %v227 = vmul.f32 %v226, 0.5
    %v228 = vmul.f32 %v223, -0.5
    %v229 = vmul.f32 %v228, %v223
    %v230 = vmul.f32 %v229, 1.442695
    %v231 = vpow.pop %v230
    %v232 = vmul.f32 %v231, 0.3989423
    %v233 = vmul.f32 %v227, %v144
    %v234 = vrsqrt.pop %v219
    %v235 = vmul.f32 %v219, %v234
    %vm236 = vcmp.eq.f32.partialorder %v219, inf
    %v237 = vsel %vm236, %v219, %v235
    %vm238 = vcmp.eq.f32.partialorder %v219, 0.0
    %v239 = vand.u32 %v219, 2147483648
    %v240 = vsel %vm238, %v239, %v237
    %v241 = vmul.f32 %v240, %v232
    %v242 = vadd.f32 %v233, %v241
    %243 = vst [vmem:[#allocation8] sm:$0xff] %v242
    // Predicated region
    $region30: #{tpu_custom_call.1} parent=1 // pred_check
      _
    $region31: #{tpu_custom_call.1} parent=1 // pred_check_branch
      %245 = sbr.rel (0) target = $region33
    $region32: #{tpu_custom_call.1} parent=1 // pred_region
      %s247 = ssub.s32 128, 128
      %248 = vsyncadd [#allocation4], %s247
      %s250 = sshll.u32 [#allocation8], 4
      %s251 = int_to_ptr.vmem [resolvable:$true] %s250
      %253 = dma.vmem_to_hbm [thread:$0]  %s251, 128, %s4, [#allocation4]
    $region33: #{tpu_custom_call.1} parent=1 // pred_fallthru
      _
    // Predicated region
    $region34: #{tpu_custom_call.1} parent=1 // pred_check
      _
    $region35: #{tpu_custom_call.1} parent=1 // pred_check_branch
      %255 = sbr.rel (0) target = $region37
    $region36: #{tpu_custom_call.1} parent=1 // pred_region
      %256 = dma.done [#allocation4], 128
    $region37: #{tpu_custom_call.1} parent=1 // pred_fallthru
      _
    %257 = vsyncpa [#allocation3], 1
    %258 = vsyncpa [#allocation6], 1
    %259 = vsyncpa [#allocation4], 1

</llo_original>
